<compile_context>
chip_gen: v5e
topology: v5e:2x2
jax: 0.10.0
libtpu: 0.0.40
codegen_flags: <defaults>
</compile_context>

<pallas_src>
import jax
import jax.numpy as jnp
from jax import lax
from jax.experimental import pallas as pl
from jax.experimental.pallas import tpu as pltpu


def _pick_strip_height(h, wo):
    """Largest strip height that divides H, gives >= 2 strips and keeps the
    output block lane dim (2*ht*wo) a multiple of 128.  Falls back to H."""
    for ht in range(min(h // 2, 64), 0, -1):
        if h % ht == 0 and (2 * ht * wo) % 128 == 0:
            return ht
    return h


def conv2d_transpose_layer(x_nchw, weight, bias, *, compute_dtype=jnp.float32):
    """Forward of Conv2dTransposeLayer(in, out, 'relu', bn=False):
    ConvTranspose2d(kernel=3, stride=2, padding=1, output_padding=1) + ReLU.

    x_nchw: (N, Cin, H, W); weight: (Cin, Cout, 3, 3) (PyTorch layout);
    bias: (Cout,).  Returns NCHW (N, Cout, 2H, 2W) float32.
    """
    n, cin, h, w = x_nchw.shape
    cin_w, cout, kh_, kw_ = weight.shape
    assert cin == cin_w and kh_ == 3 and kw_ == 3
    ho, wo = 2 * h, 2 * w

    ht = _pick_strip_height(h, wo)            # input rows per strip
    n_strips = h // ht

    # ---- cheap, input-sized glue only (no dilation, no NHWC round trip) ----
    # one zero halo row at the bottom + (row, Cin, W) ordering so the kernel can
    # slice strips on the outermost dim and batch its matmuls over rows.
    xr = jnp.transpose(
        jnp.pad(x_nchw.astype(jnp.float32), ((0, 0), (0, 0), (0, 1), (0, 0))),
        (0, 2, 1, 3))                                       # (N, H+1, Cin, W)

    wt = weight.astype(jnp.float32)
    # Per output-row-parity weight matrices.  Column blocks are ordered exactly
    # like the in-kernel patches: [kw=1 slab, kw=2 slab, kw=0 slab] for input
    # row y, then (odd rows only) the same three slabs for input row y+1.
    w_even = jnp.concatenate(                               # (Cout, 3*Cin), kh=1
        [wt[:, :, 1, 1].T, wt[:, :, 1, 2].T, wt[:, :, 1, 0].T], axis=1)
    w_odd = jnp.concatenate(                                # (Cout, 6*Cin)
        [wt[:, :, 2, 1].T, wt[:, :, 2, 2].T, wt[:, :, 2, 0].T,   # kh=2, row y
         wt[:, :, 0, 1].T, wt[:, :, 0, 2].T, wt[:, :, 0, 0].T],  # kh=0, row y+1
        axis=1)
    b2d = bias.reshape(cout, 1).astype(jnp.float32)

    dn_batched = (((2,), (1,)), ((0,), (0,)))   # (b,m,k) x (b,k,n) -> (b,m,n)

    def kernel(x_ref, we_ref, wod_ref, b_ref, o_ref):
        # x_ref  : (H+1, Cin, W)    padded image of this batch element
        # we_ref : (Cout, 3*Cin)    even-output-row weights (kh=1)
        # wod_ref: (Cout, 6*Cin)    odd-output-row weights  (kh=2 & kh=0)
        # b_ref  : (Cout, 1)
        # o_ref  : (Cout, 2*ht*Wo)  flat NCHW output rows [2*s*ht, 2*(s+1)*ht)
        s = pl.program_id(1)
        y0 = pl.multiple_of(s * ht, ht)

        xs = x_ref[pl.ds(y0, ht + 1)]                       # (ht+1, Cin, W)
        x2 = xs.reshape((ht + 1) * cin, w).astype(compute_dtype)

        # Constant 0/1 scatter matrices: place x[:, iw] at output column
        # 2*iw (kw=1), 2*iw+1 (kw=2), 2*iw-1 (kw=0).  Width boundaries are
        # handled for free (column -1 / >= Wo simply does not exist).
        src = lax.broadcasted_iota(jnp.int32, (w, wo), 0)
        dst = lax.broadcasted_iota(jnp.int32, (w, wo), 1)
        g1 = (dst == 2 * src).astype(compute_dtype)
        g2 = (dst == 2 * src + 1).astype(compute_dtype)
        g0 = (dst == 2 * src - 1).astype(compute_dtype)

        # On-chip stride-2 width scatter: one small MXU matmul per kw tap
        # (burns idle MXU instead of HBM bandwidth).
        b1 = jnp.dot(x2, g1, preferred_element_type=jnp.float32)
        b2 = jnp.dot(x2, g2, preferred_element_type=jnp.float32)
        b0 = jnp.dot(x2, g0, preferred_element_type=jnp.float32)
        b1 = b1.reshape(ht + 1, cin, wo).astype(compute_dtype)
        b2 = b2.reshape(ht + 1, cin, wo).astype(compute_dtype)
        b0 = b0.reshape(ht + 1, cin, wo).astype(compute_dtype)

        # im2col patches: contraction = taps*Cin, lanes = Wo, batched over rows.
        p_even = jnp.concatenate([b1[:ht], b2[:ht], b0[:ht]], axis=1)
        p_odd = jnp.concatenate([b1[:ht], b2[:ht], b0[:ht],
                                 b1[1:], b2[1:], b0[1:]], axis=1)

        we = jnp.broadcast_to(we_ref[...].astype(compute_dtype),
                              (ht, cout, 3 * cin))
        wod = jnp.broadcast_to(wod_ref[...].astype(compute_dtype),
                               (ht, cout, 6 * cin))
        f_even = lax.dot_general(we, p_even, dn_batched,
                                 preferred_element_type=jnp.float32)
        f_odd = lax.dot_general(wod, p_odd, dn_batched,
                                preferred_element_type=jnp.float32)

        bias_v = b_ref[...][None, :, :]                     # (1, Cout, 1)
        f_even = jnp.maximum(f_even + bias_v, 0.0)          # (ht, Cout, Wo)
        f_odd = jnp.maximum(f_odd + bias_v, 0.0)

        # Place rows into the flat lane-dense NCHW block:
        # strip-local output row 2y <- f_even[y], row 2y+1 <- f_odd[y].
        for y in range(ht):
            o_ref[:, (2 * y) * wo:(2 * y + 1) * wo] = (
                f_even[y].astype(o_ref.dtype))
            o_ref[:, (2 * y + 1) * wo:(2 * y + 2) * wo] = (
                f_odd[y].astype(o_ref.dtype))

    out_flat = pl.pallas_call(
        kernel,
        out_shape=jax.ShapeDtypeStruct((n, cout, ho * wo), jnp.float32),
        grid_spec=pltpu.PrefetchScalarGridSpec(
            num_scalar_prefetch=0,
            grid=(n, n_strips),
            in_specs=[
                pl.BlockSpec((None, h + 1, cin, w), lambda b, s: (b, 0, 0, 0)),
                pl.BlockSpec((cout, 3 * cin), lambda b, s: (0, 0)),
                pl.BlockSpec((cout, 6 * cin), lambda b, s: (0, 0)),
                pl.BlockSpec((cout, 1), lambda b, s: (0, 0)),
            ],
            out_specs=pl.BlockSpec((None, cout, 2 * ht * wo),
                                   lambda b, s: (b, 0, s)),
        ),
        compiler_params=pltpu.CompilerParams(
            dimension_semantics=("parallel", "parallel"),
            vmem_limit_bytes=32 * 1024 * 1024),
    )(xr, w_even, w_odd, b2d)

    # free reshape of the contiguous flat-spatial NCHW buffer
    return out_flat.reshape(n, cout, ho, wo)


if __name__ == "__main__":
    key = jax.random.PRNGKey(0)
    k1, k2, k3 = jax.random.split(key, 3)

    N, CIN, H, W = 2, 4, 16, 16
    COUT, K = 8, 3

    x = jax.random.normal(k1, (N, CIN, H, W), jnp.float32)
    # Deterministic params matching torch.nn.ConvTranspose2d(CIN, COUT, 3) shapes:
    # weight (CIN, COUT, K, K), bias (COUT,), uniform(-1/sqrt(fan), 1/sqrt(fan)).
    fan = CIN * K * K
    bound = 1.0 / (fan ** 0.5)
    weight = jax.random.uniform(k2, (CIN, COUT, K, K), jnp.float32, -bound, bound)
    bias = jax.random.uniform(k3, (COUT,), jnp.float32, -bound, bound)

    out = jax.block_until_ready(conv2d_transpose_layer(x, weight, bias))
    assert out.shape == (N, COUT, 2 * H, 2 * W), out.shape

    # plain-JAX reference (lhs-dilated conv == transposed conv) for sanity
    x_nhwc = jnp.transpose(x, (0, 2, 3, 1))
    w_hwio = jnp.transpose(weight[:, :, ::-1, ::-1], (2, 3, 0, 1))
    ref = lax.conv_general_dilated(
        x_nhwc, w_hwio, window_strides=(1, 1),
        padding=[(K - 2, K - 1), (K - 2, K - 1)],   # (1, 2) each side
        lhs_dilation=(2, 2),
        dimension_numbers=("NHWC", "HWIO", "NHWC"))
    ref = jnp.maximum(ref + bias.reshape(1, 1, 1, COUT), 0.0)
    ref = jnp.transpose(ref, (0, 3, 1, 2))

    max_err = float(jnp.max(jnp.abs(out - ref)))
    # tolerance covers default-precision MXU pass differences vs the XLA conv
    assert jnp.allclose(out, ref, rtol=1e-3, atol=1e-3), max_err

    print("KERNEL_OK")
</pallas_src>

<mosaic_0001>
module attributes {stable_mosaic.version = 11 : i64} {
  func.func @kernel(%arg0: i32, %arg1: i32, %arg2: memref<1x17x4x16xf32, #tpu.memory_space<vmem>>, %arg3: memref<8x12xf32, #tpu.memory_space<vmem>>, %arg4: memref<8x24xf32, #tpu.memory_space<vmem>>, %arg5: memref<8x1xf32, #tpu.memory_space<vmem>>, %arg6: memref<1x8x512xf32, #tpu.memory_space<vmem>>) attributes {dimension_semantics = [#tpu.dimension_semantics<parallel>, #tpu.dimension_semantics<parallel>], iteration_bounds = array<i64: 2, 2>, scalar_prefetch = 0 : i64, scratch_operands = 0 : i64, tpu.core_type = #tpu.core_type<tc>, window_params = [{transform_indices = @transform_0, window_bounds = array<i64: 1, 17, 4, 16>}, {pipeline_mode = #tpu.pipeline_mode<synchronous>, transform_indices = @transform_1, window_bounds = array<i64: 8, 12>}, {pipeline_mode = #tpu.pipeline_mode<synchronous>, transform_indices = @transform_2, window_bounds = array<i64: 8, 24>}, {pipeline_mode = #tpu.pipeline_mode<synchronous>, transform_indices = @transform_3, window_bounds = array<i64: 8, 1>}, {transform_indices = @transform_4, window_bounds = array<i64: 1, 8, 512>}]} {
    %c8_i32 = arith.constant 8 : i32
    %0 = arith.muli %arg1, %c8_i32 : i32
    %1 = tpu.assume_multiple %0, 8 : i32
    %c0 = arith.constant 0 : index
    %2 = arith.index_cast %1 : i32 to index
    %c0_0 = arith.constant 0 : index
    %c0_1 = arith.constant 0 : index
    %3 = vector.load %arg2[%c0, %2, %c0_0, %c0_1] : memref<1x17x4x16xf32, #tpu.memory_space<vmem>>, vector<1x9x4x16xf32>
    %4 = vector.shape_cast %3 : vector<1x9x4x16xf32> to vector<9x4x16xf32>
    %5 = vector.shape_cast %4 : vector<9x4x16xf32> to vector<36x16xf32>
    %6 = tpu.iota {dimensions = array<i32: 0>} : vector<16x32xi32>
    %7 = tpu.iota {dimensions = array<i32: 1>} : vector<16x32xi32>
    %c2_i32 = arith.constant 2 : i32
    %8 = vector.broadcast %c2_i32 : i32 to vector<16x32xi32>
    %9 = arith.muli %8, %6 : vector<16x32xi32>
    %10 = arith.cmpi eq, %7, %9 : vector<16x32xi32>
    %11 = arith.extui %10 : vector<16x32xi1> to vector<16x32xi32>
    %12 = arith.sitofp %11 : vector<16x32xi32> to vector<16x32xf32>
    %c2_i32_2 = arith.constant 2 : i32
    %13 = vector.broadcast %c2_i32_2 : i32 to vector<16x32xi32>
    %14 = arith.muli %13, %6 : vector<16x32xi32>
    %c1_i32 = arith.constant 1 : i32
    %15 = vector.broadcast %c1_i32 : i32 to vector<16x32xi32>
    %16 = arith.addi %14, %15 : vector<16x32xi32>
    %17 = arith.cmpi eq, %7, %16 : vector<16x32xi32>
    %18 = arith.extui %17 : vector<16x32xi1> to vector<16x32xi32>
    %19 = arith.sitofp %18 : vector<16x32xi32> to vector<16x32xf32>
    %c2_i32_3 = arith.constant 2 : i32
    %20 = vector.broadcast %c2_i32_3 : i32 to vector<16x32xi32>
    %21 = arith.muli %20, %6 : vector<16x32xi32>
    %c1_i32_4 = arith.constant 1 : i32
    %22 = vector.broadcast %c1_i32_4 : i32 to vector<16x32xi32>
    %23 = arith.subi %21, %22 : vector<16x32xi32>
    %24 = arith.cmpi eq, %7, %23 : vector<16x32xi32>
    %25 = arith.extui %24 : vector<16x32xi1> to vector<16x32xi32>
    %26 = arith.sitofp %25 : vector<16x32xi32> to vector<16x32xf32>
    %cst = arith.constant dense<0.000000e+00> : vector<36x32xf32>
    %27 = tpu.matmul %5, %12, %cst {dimension_numbers = #tpu.dot_dimension_numbers<[1], [0], [0], [1], [0, 0, 1, 1], [], []>} : vector<36x16xf32>, vector<16x32xf32>, vector<36x32xf32> -> vector<36x32xf32>
    %cst_5 = arith.constant dense<0.000000e+00> : vector<36x32xf32>
    %28 = tpu.matmul %5, %19, %cst_5 {dimension_numbers = #tpu.dot_dimension_numbers<[1], [0], [0], [1], [0, 0, 1, 1], [], []>} : vector<36x16xf32>, vector<16x32xf32>, vector<36x32xf32> -> vector<36x32xf32>
    %cst_6 = arith.constant dense<0.000000e+00> : vector<36x32xf32>
    %29 = tpu.matmul %5, %26, %cst_6 {dimension_numbers = #tpu.dot_dimension_numbers<[1], [0], [0], [1], [0, 0, 1, 1], [], []>} : vector<36x16xf32>, vector<16x32xf32>, vector<36x32xf32> -> vector<36x32xf32>
    %30 = vector.shape_cast %27 : vector<36x32xf32> to vector<9x4x32xf32>
    %31 = vector.shape_cast %28 : vector<36x32xf32> to vector<9x4x32xf32>
    %32 = vector.shape_cast %29 : vector<36x32xf32> to vector<9x4x32xf32>
    %33 = vector.extract_strided_slice %30 {offsets = [0, 0, 0], sizes = [8, 4, 32], strides = [1, 1, 1]} : vector<9x4x32xf32> to vector<8x4x32xf32>
    %34 = vector.extract_strided_slice %31 {offsets = [0, 0, 0], sizes = [8, 4, 32], strides = [1, 1, 1]} : vector<9x4x32xf32> to vector<8x4x32xf32>
    %35 = vector.extract_strided_slice %32 {offsets = [0, 0, 0], sizes = [8, 4, 32], strides = [1, 1, 1]} : vector<9x4x32xf32> to vector<8x4x32xf32>
    %36 = tpu.concatenate %33, %34, %35 in 1 : vector<8x4x32xf32>, vector<8x4x32xf32>, vector<8x4x32xf32> -> vector<8x12x32xf32>
    %37 = vector.extract_strided_slice %30 {offsets = [0, 0, 0], sizes = [8, 4, 32], strides = [1, 1, 1]} : vector<9x4x32xf32> to vector<8x4x32xf32>
    %38 = vector.extract_strided_slice %31 {offsets = [0, 0, 0], sizes = [8, 4, 32], strides = [1, 1, 1]} : vector<9x4x32xf32> to vector<8x4x32xf32>
    %39 = vector.extract_strided_slice %32 {offsets = [0, 0, 0], sizes = [8, 4, 32], strides = [1, 1, 1]} : vector<9x4x32xf32> to vector<8x4x32xf32>
    %40 = vector.extract_strided_slice %30 {offsets = [1, 0, 0], sizes = [8, 4, 32], strides = [1, 1, 1]} : vector<9x4x32xf32> to vector<8x4x32xf32>
    %41 = vector.extract_strided_slice %31 {offsets = [1, 0, 0], sizes = [8, 4, 32], strides = [1, 1, 1]} : vector<9x4x32xf32> to vector<8x4x32xf32>
    %42 = vector.extract_strided_slice %32 {offsets = [1, 0, 0], sizes = [8, 4, 32], strides = [1, 1, 1]} : vector<9x4x32xf32> to vector<8x4x32xf32>
    %43 = tpu.concatenate %37, %38, %39, %40, %41, %42 in 1 : vector<8x4x32xf32>, vector<8x4x32xf32>, vector<8x4x32xf32>, vector<8x4x32xf32>, vector<8x4x32xf32>, vector<8x4x32xf32> -> vector<8x24x32xf32>
    %c0_7 = arith.constant 0 : index
    %c0_8 = arith.constant 0 : index
    %44 = vector.load %arg3[%c0_7, %c0_8] : memref<8x12xf32, #tpu.memory_space<vmem>>, vector<8x12xf32>
    %45 = vector.shape_cast %44 : vector<8x12xf32> to vector<1x8x12xf32>
    %46 = vector.broadcast %45 : vector<1x8x12xf32> to vector<8x8x12xf32>
    %c0_9 = arith.constant 0 : index
    %c0_10 = arith.constant 0 : index
    %47 = vector.load %arg4[%c0_9, %c0_10] : memref<8x24xf32, #tpu.memory_space<vmem>>, vector<8x24xf32>
    %48 = vector.shape_cast %47 : vector<8x24xf32> to vector<1x8x24xf32>
    %49 = vector.broadcast %48 : vector<1x8x24xf32> to vector<8x8x24xf32>
    %cst_11 = arith.constant dense<0.000000e+00> : vector<8x8x32xf32>
    %50 = tpu.matmul %46, %36, %cst_11 {dimension_numbers = #tpu.dot_dimension_numbers<[2], [1], [1], [2], [0, 0, 0, 1, 1, 2], [0], [0]>} : vector<8x8x12xf32>, vector<8x12x32xf32>, vector<8x8x32xf32> -> vector<8x8x32xf32>
    %cst_12 = arith.constant dense<0.000000e+00> : vector<8x8x32xf32>
    %51 = tpu.matmul %49, %43, %cst_12 {dimension_numbers = #tpu.dot_dimension_numbers<[2], [1], [1], [2], [0, 0, 0, 1, 1, 2], [0], [0]>} : vector<8x8x24xf32>, vector<8x24x32xf32>, vector<8x8x32xf32> -> vector<8x8x32xf32>
    %c0_13 = arith.constant 0 : index
    %c0_14 = arith.constant 0 : index
    %52 = vector.load %arg5[%c0_13, %c0_14] : memref<8x1xf32, #tpu.memory_space<vmem>>, vector<8x1xf32>
    %53 = vector.shape_cast %52 : vector<8x1xf32> to vector<1x8x1xf32>
    %54 = vector.broadcast %53 : vector<1x8x1xf32> to vector<8x8x32xf32>
    %55 = arith.addf %50, %54 : vector<8x8x32xf32>
    %cst_15 = arith.constant 0.000000e+00 : f32
    %56 = vector.broadcast %cst_15 : f32 to vector<8x8x32xf32>
    %57 = arith.maximumf %55, %56 : vector<8x8x32xf32>
    %58 = vector.broadcast %53 : vector<1x8x1xf32> to vector<8x8x32xf32>
    %59 = arith.addf %51, %58 : vector<8x8x32xf32>
    %cst_16 = arith.constant 0.000000e+00 : f32
    %60 = vector.broadcast %cst_16 : f32 to vector<8x8x32xf32>
    %61 = arith.maximumf %59, %60 : vector<8x8x32xf32>
    %62 = vector.extract_strided_slice %57 {offsets = [0, 0, 0], sizes = [1, 8, 32], strides = [1, 1, 1]} : vector<8x8x32xf32> to vector<1x8x32xf32>
    %63 = vector.shape_cast %62 : vector<1x8x32xf32> to vector<8x32xf32>
    %c0_17 = arith.constant 0 : index
    %c0_18 = arith.constant 0 : index
    %c0_19 = arith.constant 0 : index
    %64 = vector.load %arg6[%c0_17, %c0_18, %c0_19] : memref<1x8x512xf32, #tpu.memory_space<vmem>>, vector<1x8x32xf32>
    %65 = vector.shape_cast %64 : vector<1x8x32xf32> to vector<8x32xf32>
    %66 = vector.shape_cast %63 : vector<8x32xf32> to vector<1x8x32xf32>
    tpu.vector_store %arg6[%c0_17, %c0_18, %c0_19], %66 {strides = array<i32>} : memref<1x8x512xf32, #tpu.memory_space<vmem>>, vector<1x8x32xf32>,
    %67 = vector.extract_strided_slice %61 {offsets = [0, 0, 0], sizes = [1, 8, 32], strides = [1, 1, 1]} : vector<8x8x32xf32> to vector<1x8x32xf32>
    %68 = vector.shape_cast %67 : vector<1x8x32xf32> to vector<8x32xf32>
    %c0_20 = arith.constant 0 : index
    %c0_21 = arith.constant 0 : index
    %c32 = arith.constant 32 : index
    %69 = vector.load %arg6[%c0_20, %c0_21, %c32] : memref<1x8x512xf32, #tpu.memory_space<vmem>>, vector<1x8x32xf32>
    %70 = vector.shape_cast %69 : vector<1x8x32xf32> to vector<8x32xf32>
    %71 = vector.shape_cast %68 : vector<8x32xf32> to vector<1x8x32xf32>
    tpu.vector_store %arg6[%c0_20, %c0_21, %c32], %71 {strides = array<i32>} : memref<1x8x512xf32, #tpu.memory_space<vmem>>, vector<1x8x32xf32>,
    %72 = vector.extract_strided_slice %57 {offsets = [1, 0, 0], sizes = [1, 8, 32], strides = [1, 1, 1]} : vector<8x8x32xf32> to vector<1x8x32xf32>
    %73 = vector.shape_cast %72 : vector<1x8x32xf32> to vector<8x32xf32>
    %c0_22 = arith.constant 0 : index
    %c0_23 = arith.constant 0 : index
    %c64 = arith.constant 64 : index
    %74 = vector.load %arg6[%c0_22, %c0_23, %c64] : memref<1x8x512xf32, #tpu.memory_space<vmem>>, vector<1x8x32xf32>
    %75 = vector.shape_cast %74 : vector<1x8x32xf32> to vector<8x32xf32>
    %76 = vector.shape_cast %73 : vector<8x32xf32> to vector<1x8x32xf32>
    tpu.vector_store %arg6[%c0_22, %c0_23, %c64], %76 {strides = array<i32>} : memref<1x8x512xf32, #tpu.memory_space<vmem>>, vector<1x8x32xf32>,
    %77 = vector.extract_strided_slice %61 {offsets = [1, 0, 0], sizes = [1, 8, 32], strides = [1, 1, 1]} : vector<8x8x32xf32> to vector<1x8x32xf32>
    %78 = vector.shape_cast %77 : vector<1x8x32xf32> to vector<8x32xf32>
    %c0_24 = arith.constant 0 : index
    %c0_25 = arith.constant 0 : index
    %c96 = arith.constant 96 : index
    %79 = vector.load %arg6[%c0_24, %c0_25, %c96] : memref<1x8x512xf32, #tpu.memory_space<vmem>>, vector<1x8x32xf32>
    %80 = vector.shape_cast %79 : vector<1x8x32xf32> to vector<8x32xf32>
    %81 = vector.shape_cast %78 : vector<8x32xf32> to vector<1x8x32xf32>
    tpu.vector_store %arg6[%c0_24, %c0_25, %c96], %81 {strides = array<i32>} : memref<1x8x512xf32, #tpu.memory_space<vmem>>, vector<1x8x32xf32>,
    %82 = vector.extract_strided_slice %57 {offsets = [2, 0, 0], sizes = [1, 8, 32], strides = [1, 1, 1]} : vector<8x8x32xf32> to vector<1x8x32xf32>
    %83 = vector.shape_cast %82 : vector<1x8x32xf32> to vector<8x32xf32>
    %c0_26 = arith.constant 0 : index
    %c0_27 = arith.constant 0 : index
    %c128 = arith.constant 128 : index
    %84 = vector.load %arg6[%c0_26, %c0_27, %c128] : memref<1x8x512xf32, #tpu.memory_space<vmem>>, vector<1x8x32xf32>
    %85 = vector.shape_cast %84 : vector<1x8x32xf32> to vector<8x32xf32>
    %86 = vector.shape_cast %83 : vector<8x32xf32> to vector<1x8x32xf32>
    tpu.vector_store %arg6[%c0_26, %c0_27, %c128], %86 {strides = array<i32>} : memref<1x8x512xf32, #tpu.memory_space<vmem>>, vector<1x8x32xf32>,
    %87 = vector.extract_strided_slice %61 {offsets = [2, 0, 0], sizes = [1, 8, 32], strides = [1, 1, 1]} : vector<8x8x32xf32> to vector<1x8x32xf32>
    %88 = vector.shape_cast %87 : vector<1x8x32xf32> to vector<8x32xf32>
    %c0_28 = arith.constant 0 : index
    %c0_29 = arith.constant 0 : index
    %c160 = arith.constant 160 : index
    %89 = vector.load %arg6[%c0_28, %c0_29, %c160] : memref<1x8x512xf32, #tpu.memory_space<vmem>>, vector<1x8x32xf32>
    %90 = vector.shape_cast %89 : vector<1x8x32xf32> to vector<8x32xf32>
    %91 = vector.shape_cast %88 : vector<8x32xf32> to vector<1x8x32xf32>
    tpu.vector_store %arg6[%c0_28, %c0_29, %c160], %91 {strides = array<i32>} : memref<1x8x512xf32, #tpu.memory_space<vmem>>, vector<1x8x32xf32>,
    %92 = vector.extract_strided_slice %57 {offsets = [3, 0, 0], sizes = [1, 8, 32], strides = [1, 1, 1]} : vector<8x8x32xf32> to vector<1x8x32xf32>
    %93 = vector.shape_cast %92 : vector<1x8x32xf32> to vector<8x32xf32>
    %c0_30 = arith.constant 0 : index
    %c0_31 = arith.constant 0 : index
    %c192 = arith.constant 192 : index
    %94 = vector.load %arg6[%c0_30, %c0_31, %c192] : memref<1x8x512xf32, #tpu.memory_space<vmem>>, vector<1x8x32xf32>
    %95 = vector.shape_cast %94 : vector<1x8x32xf32> to vector<8x32xf32>
    %96 = vector.shape_cast %93 : vector<8x32xf32> to vector<1x8x32xf32>
    tpu.vector_store %arg6[%c0_30, %c0_31, %c192], %96 {strides = array<i32>} : memref<1x8x512xf32, #tpu.memory_space<vmem>>, vector<1x8x32xf32>,
    %97 = vector.extract_strided_slice %61 {offsets = [3, 0, 0], sizes = [1, 8, 32], strides = [1, 1, 1]} : vector<8x8x32xf32> to vector<1x8x32xf32>
    %98 = vector.shape_cast %97 : vector<1x8x32xf32> to vector<8x32xf32>
    %c0_32 = arith.constant 0 : index
    %c0_33 = arith.constant 0 : index
    %c224 = arith.constant 224 : index
    %99 = vector.load %arg6[%c0_32, %c0_33, %c224] : memref<1x8x512xf32, #tpu.memory_space<vmem>>, vector<1x8x32xf32>
    %100 = vector.shape_cast %99 : vector<1x8x32xf32> to vector<8x32xf32>
    %101 = vector.shape_cast %98 : vector<8x32xf32> to vector<1x8x32xf32>
    tpu.vector_store %arg6[%c0_32, %c0_33, %c224], %101 {strides = array<i32>} : memref<1x8x512xf32, #tpu.memory_space<vmem>>, vector<1x8x32xf32>,
    %102 = vector.extract_strided_slice %57 {offsets = [4, 0, 0], sizes = [1, 8, 32], strides = [1, 1, 1]} : vector<8x8x32xf32> to vector<1x8x32xf32>
    %103 = vector.shape_cast %102 : vector<1x8x32xf32> to vector<8x32xf32>
    %c0_34 = arith.constant 0 : index
    %c0_35 = arith.constant 0 : index
    %c256 = arith.constant 256 : index
    %104 = vector.load %arg6[%c0_34, %c0_35, %c256] : memref<1x8x512xf32, #tpu.memory_space<vmem>>, vector<1x8x32xf32>
    %105 = vector.shape_cast %104 : vector<1x8x32xf32> to vector<8x32xf32>
    %106 = vector.shape_cast %103 : vector<8x32xf32> to vector<1x8x32xf32>
    tpu.vector_store %arg6[%c0_34, %c0_35, %c256], %106 {strides = array<i32>} : memref<1x8x512xf32, #tpu.memory_space<vmem>>, vector<1x8x32xf32>,
    %107 = vector.extract_strided_slice %61 {offsets = [4, 0, 0], sizes = [1, 8, 32], strides = [1, 1, 1]} : vector<8x8x32xf32> to vector<1x8x32xf32>
    %108 = vector.shape_cast %107 : vector<1x8x32xf32> to vector<8x32xf32>
    %c0_36 = arith.constant 0 : index
    %c0_37 = arith.constant 0 : index
    %c288 = arith.constant 288 : index
    %109 = vector.load %arg6[%c0_36, %c0_37, %c288] : memref<1x8x512xf32, #tpu.memory_space<vmem>>, vector<1x8x32xf32>
    %110 = vector.shape_cast %109 : vector<1x8x32xf32> to vector<8x32xf32>
    %111 = vector.shape_cast %108 : vector<8x32xf32> to vector<1x8x32xf32>
    tpu.vector_store %arg6[%c0_36, %c0_37, %c288], %111 {strides = array<i32>} : memref<1x8x512xf32, #tpu.memory_space<vmem>>, vector<1x8x32xf32>,
    %112 = vector.extract_strided_slice %57 {offsets = [5, 0, 0], sizes = [1, 8, 32], strides = [1, 1, 1]} : vector<8x8x32xf32> to vector<1x8x32xf32>
    %113 = vector.shape_cast %112 : vector<1x8x32xf32> to vector<8x32xf32>
    %c0_38 = arith.constant 0 : index
    %c0_39 = arith.constant 0 : index
    %c320 = arith.constant 320 : index
    %114 = vector.load %arg6[%c0_38, %c0_39, %c320] : memref<1x8x512xf32, #tpu.memory_space<vmem>>, vector<1x8x32xf32>
    %115 = vector.shape_cast %114 : vector<1x8x32xf32> to vector<8x32xf32>
    %116 = vector.shape_cast %113 : vector<8x32xf32> to vector<1x8x32xf32>
    tpu.vector_store %arg6[%c0_38, %c0_39, %c320], %116 {strides = array<i32>} : memref<1x8x512xf32, #tpu.memory_space<vmem>>, vector<1x8x32xf32>,
    %117 = vector.extract_strided_slice %61 {offsets = [5, 0, 0], sizes = [1, 8, 32], strides = [1, 1, 1]} : vector<8x8x32xf32> to vector<1x8x32xf32>
    %118 = vector.shape_cast %117 : vector<1x8x32xf32> to vector<8x32xf32>
    %c0_40 = arith.constant 0 : index
    %c0_41 = arith.constant 0 : index
    %c352 = arith.constant 352 : index
    %119 = vector.load %arg6[%c0_40, %c0_41, %c352] : memref<1x8x512xf32, #tpu.memory_space<vmem>>, vector<1x8x32xf32>
    %120 = vector.shape_cast %119 : vector<1x8x32xf32> to vector<8x32xf32>
    %121 = vector.shape_cast %118 : vector<8x32xf32> to vector<1x8x32xf32>
    tpu.vector_store %arg6[%c0_40, %c0_41, %c352], %121 {strides = array<i32>} : memref<1x8x512xf32, #tpu.memory_space<vmem>>, vector<1x8x32xf32>,
    %122 = vector.extract_strided_slice %57 {offsets = [6, 0, 0], sizes = [1, 8, 32], strides = [1, 1, 1]} : vector<8x8x32xf32> to vector<1x8x32xf32>
    %123 = vector.shape_cast %122 : vector<1x8x32xf32> to vector<8x32xf32>
    %c0_42 = arith.constant 0 : index
    %c0_43 = arith.constant 0 : index
    %c384 = arith.constant 384 : index
    %124 = vector.load %arg6[%c0_42, %c0_43, %c384] : memref<1x8x512xf32, #tpu.memory_space<vmem>>, vector<1x8x32xf32>
    %125 = vector.shape_cast %124 : vector<1x8x32xf32> to vector<8x32xf32>
    %126 = vector.shape_cast %123 : vector<8x32xf32> to vector<1x8x32xf32>
    tpu.vector_store %arg6[%c0_42, %c0_43, %c384], %126 {strides = array<i32>} : memref<1x8x512xf32, #tpu.memory_space<vmem>>, vector<1x8x32xf32>,
    %127 = vector.extract_strided_slice %61 {offsets = [6, 0, 0], sizes = [1, 8, 32], strides = [1, 1, 1]} : vector<8x8x32xf32> to vector<1x8x32xf32>
    %128 = vector.shape_cast %127 : vector<1x8x32xf32> to vector<8x32xf32>
    %c0_44 = arith.constant 0 : index
    %c0_45 = arith.constant 0 : index
    %c416 = arith.constant 416 : index
    %129 = vector.load %arg6[%c0_44, %c0_45, %c416] : memref<1x8x512xf32, #tpu.memory_space<vmem>>, vector<1x8x32xf32>
    %130 = vector.shape_cast %129 : vector<1x8x32xf32> to vector<8x32xf32>
    %131 = vector.shape_cast %128 : vector<8x32xf32> to vector<1x8x32xf32>
    tpu.vector_store %arg6[%c0_44, %c0_45, %c416], %131 {strides = array<i32>} : memref<1x8x512xf32, #tpu.memory_space<vmem>>, vector<1x8x32xf32>,
    %132 = vector.extract_strided_slice %57 {offsets = [7, 0, 0], sizes = [1, 8, 32], strides = [1, 1, 1]} : vector<8x8x32xf32> to vector<1x8x32xf32>
    %133 = vector.shape_cast %132 : vector<1x8x32xf32> to vector<8x32xf32>
    %c0_46 = arith.constant 0 : index
    %c0_47 = arith.constant 0 : index
    %c448 = arith.constant 448 : index
    %134 = vector.load %arg6[%c0_46, %c0_47, %c448] : memref<1x8x512xf32, #tpu.memory_space<vmem>>, vector<1x8x32xf32>
    %135 = vector.shape_cast %134 : vector<1x8x32xf32> to vector<8x32xf32>
    %136 = vector.shape_cast %133 : vector<8x32xf32> to vector<1x8x32xf32>
    tpu.vector_store %arg6[%c0_46, %c0_47, %c448], %136 {strides = array<i32>} : memref<1x8x512xf32, #tpu.memory_space<vmem>>, vector<1x8x32xf32>,
    %137 = vector.extract_strided_slice %61 {offsets = [7, 0, 0], sizes = [1, 8, 32], strides = [1, 1, 1]} : vector<8x8x32xf32> to vector<1x8x32xf32>
    %138 = vector.shape_cast %137 : vector<1x8x32xf32> to vector<8x32xf32>
    %c0_48 = arith.constant 0 : index
    %c0_49 = arith.constant 0 : index
    %c480 = arith.constant 480 : index
    %139 = vector.load %arg6[%c0_48, %c0_49, %c480] : memref<1x8x512xf32, #tpu.memory_space<vmem>>, vector<1x8x32xf32>
    %140 = vector.shape_cast %139 : vector<1x8x32xf32> to vector<8x32xf32>
    %141 = vector.shape_cast %138 : vector<8x32xf32> to vector<1x8x32xf32>
    tpu.vector_store %arg6[%c0_48, %c0_49, %c480], %141 {strides = array<i32>} : memref<1x8x512xf32, #tpu.memory_space<vmem>>, vector<1x8x32xf32>,
    return
  }
  func.func @transform_0(%arg0: i32, %arg1: i32) -> (i32, i32, i32, i32) {
    %c0_i32 = arith.constant 0 : i32
    %c0_i32_0 = arith.constant 0 : i32
    %c0_i32_1 = arith.constant 0 : i32
    %c0_i32_2 = arith.constant 0 : i32
    return %arg0, %c0_i32, %c0_i32_0, %c0_i32_1 : i32, i32, i32, i32
  }
  func.func @transform_1(%arg0: i32, %arg1: i32) -> (i32, i32) {
    %c0_i32 = arith.constant 0 : i32
    %c0_i32_0 = arith.constant 0 : i32
    %c0_i32_1 = arith.constant 0 : i32
    return %c0_i32, %c0_i32_0 : i32, i32
  }
  func.func @transform_2(%arg0: i32, %arg1: i32) -> (i32, i32) {
    %c0_i32 = arith.constant 0 : i32
    %c0_i32_0 = arith.constant 0 : i32
    %c0_i32_1 = arith.constant 0 : i32
    return %c0_i32, %c0_i32_0 : i32, i32
  }
  func.func @transform_3(%arg0: i32, %arg1: i32) -> (i32, i32) {
    %c0_i32 = arith.constant 0 : i32
    %c0_i32_0 = arith.constant 0 : i32
    %c0_i32_1 = arith.constant 0 : i32
    return %c0_i32, %c0_i32_0 : i32, i32
  }
  func.func @transform_4(%arg0: i32, %arg1: i32) -> (i32, i32, i32) {
    %c0_i32 = arith.constant 0 : i32
    %c0_i32_0 = arith.constant 0 : i32
    return %arg0, %c0_i32, %arg1 : i32, i32, i32
  }
}

</mosaic_0001>

<llo_original>
// kernel: tpu_custom_call.1
$region0: #{tpu_custom_call.1}
  #allocation0 [shape = 'u32[]', space=smem, size = 0x4, offset = 0x4, fixed_abs, tag = 'smem constant byte address 0x4 - core index']
  #allocation1 [shape = 'u32[72,128]{1,0:T(1,128)}', space=vmem, size = 0x9000, scoped, tag = 'internal scratch']
  %s0 = inlined_call_operand.vmem [shape: f32[2,17,4,16], index: 0, kind: input, shape index: {}]
  %s1 = inlined_call_operand.vmem [shape: f32[8,12], index: 1, kind: input, shape index: {}]
  %s2 = inlined_call_operand.vmem [shape: f32[8,24], index: 2, kind: input, shape index: {}]
  %s3 = inlined_call_operand.vmem [shape: f32[8,1], index: 3, kind: input, shape index: {}]
  %s4 = inlined_call_operand.hbm [shape: f32[2,8,1024], index: 4, kind: output, shape index: {}]
  %s5 = sld [smem:[#allocation0]]
  $region49: #{tpu_custom_call.1} parent=0
    _
  %s7 = ssub.s32 1, %s5
  %s8 = scalar_select 0, %s7, %s5
  $region1: #{tpu_custom_call.1} parent=0
    #allocation2 [shape = 'u8[32768]{0}', space=vmem, size = 0x8000, scoped, tag = 'output window, operand 0']
    #allocation3 [shape = 's32[2]{0}', space=sflag, size = 0x8, scoped, tag = 'scoped memory for tpu_custom_call.1']
    %9 = vsyncpa [#allocation3], 0
    %s10 = scalar_lea.sflag [#allocation3], 1
    %11 = vsyncpa %s10, 0
    loop: start=0, step=1, limit=6
    $region2: #{tpu_custom_call.1} parent=1 // loop_pre_header
      _
    $region3: #{tpu_custom_call.1} parent=1 // loop_header
      %s13 = sphi 0, %s17
      %p14 = scmp.ge.s32.totalorder %s13, 6
      %s20 = sphi 0, %s32
      %s21 = sphi 0, %s28
      %s22 = sphi 0, %s20
      %s23 = sphi 0, %s21
      %s24 = sphi 0, %s22
      %s25 = sphi 0, %s23
      %s35 = sphi 0, %s37
      %s38 = sphi 0, %s35
      %s39 = sphi 0, %s38
      %s55 = sphi 0, %s39
      %s59 = sphi 0, %s59
      %s61 = sphi 0, %s59
      %s62 = sphi 0, %s61
      %s76 = sphi 0, %s62
      %s80 = sphi 0, %s80
      %s82 = sphi 0, %s80
      %s83 = sphi 0, %s82
      %s97 = sphi 0, %s83
      %s101 = sphi 0, %s101
      %s103 = sphi 0, %s101
      %s104 = sphi 0, %s103
      %s118 = sphi 0, %s104
      %s126 = sphi 0, %s128
      %s129 = sphi 0, %s126
      %s130 = sphi 0, %s129
      %s146 = sphi 0, %s130
    $region4: #{tpu_custom_call.1} parent=1 // loop_header_branch
      %16 = sbr.rel (%p14) target = $region8
    $region5: #{tpu_custom_call.1} parent=1 // loop_body
      %s18 = ssub.s32 %s13, 1
      %s19 = ssub.s32 %s13, 2
      %s26 = sadd.s32 1, %s21
      %p27 = scmp.ge.s32.totalorder %s26, 2
      %s28 = scalar_select %p27, 0, %s26
      %s29 = sadd.s32 1, %s20
      %s30 = scalar_select %p27, %s29, %s20
      %p31 = scmp.ge.s32.totalorder %s30, 2
      %s32 = scalar_select %p31, 0, %s30
      %s33 = ssub.s32 %s20, %s32
      %p34 = scmp.eq.s32.totalorder %s33, 0
      %s36 = sadd.s32 %s35, 1
      %s37 = scalar_select %p34, %s35, %s36
      %p40 = pneg %p34
      %p41 = scmp.eq.s32.totalorder %s13, 3
      %p42 = por %p40, %p41
      %p43 = scmp.ne.s32.totalorder %s35, %s38
      %p44 = scmp.eq.s32.totalorder %s13, 0
      %p45 = por %p43, %p44
      %p46 = scmp.ne.s32.totalorder %s35, %s38
      %p47 = scmp.eq.s32.totalorder %s18, 3
      %p48 = por %p46, %p47
      %p49 = scmp.ne.s32.totalorder %s38, %s39
      %p50 = scmp.eq.s32.totalorder %s18, 0
      %p51 = por %p49, %p50
      %p52 = scmp.ne.s32.totalorder %s38, %s39
      %p53 = scmp.eq.s32.totalorder %s19, 3
      %p54 = por %p52, %p53
      %p56 = scmp.ne.s32.totalorder %s39, %s55
      %p57 = scmp.eq.s32.totalorder %s19, 0
      %p58 = por %p56, %p57
      %s60 = sadd.s32 %s59, 1
      %p63 = scmp.eq.s32.totalorder %s13, 3
      %p64 = scmp.ne.s32.totalorder %s59, %s61
      %p65 = scmp.eq.s32.totalorder %s13, 0
      %p66 = por %p64, %p65
      %p67 = scmp.ne.s32.totalorder %s59, %s61
      %p68 = scmp.eq.s32.totalorder %s18, 3
      %p69 = por %p67, %p68
      %p70 = scmp.ne.s32.totalorder %s61, %s62
      %p71 = scmp.eq.s32.totalorder %s18, 0
      %p72 = por %p70, %p71
      %p73 = scmp.ne.s32.totalorder %s61, %s62
      %p74 = scmp.eq.s32.totalorder %s19, 3
      %p75 = por %p73, %p74
      %p77 = scmp.ne.s32.totalorder %s62, %s76
      %p78 = scmp.eq.s32.totalorder %s19, 0
      %p79 = por %p77, %p78
      %s81 = sadd.s32 %s80, 1
      %p84 = scmp.eq.s32.totalorder %s13, 3
      %p85 = scmp.ne.s32.totalorder %s80, %s82
      %p86 = scmp.eq.s32.totalorder %s13, 0
      %p87 = por %p85, %p86
      %p88 = scmp.ne.s32.totalorder %s80, %s82
      %p89 = scmp.eq.s32.totalorder %s18, 3
      %p90 = por %p88, %p89
      %p91 = scmp.ne.s32.totalorder %s82, %s83
      %p92 = scmp.eq.s32.totalorder %s18, 0
      %p93 = por %p91, %p92
      %p94 = scmp.ne.s32.totalorder %s82, %s83
      %p95 = scmp.eq.s32.totalorder %s19, 3
      %p96 = por %p94, %p95
      %p98 = scmp.ne.s32.totalorder %s83, %s97
      %p99 = scmp.eq.s32.totalorder %s19, 0
      %p100 = por %p98, %p99
      %s102 = sadd.s32 %s101, 1
      %p105 = scmp.eq.s32.totalorder %s13, 3
      %p106 = scmp.ne.s32.totalorder %s101, %s103
      %p107 = scmp.eq.s32.totalorder %s13, 0
      %p108 = por %p106, %p107
      %p109 = scmp.ne.s32.totalorder %s101, %s103
      %p110 = scmp.eq.s32.totalorder %s18, 3
      %p111 = por %p109, %p110
      %p112 = scmp.ne.s32.totalorder %s103, %s104
      %p113 = scmp.eq.s32.totalorder %s18, 0
      %p114 = por %p112, %p113
      %p115 = scmp.ne.s32.totalorder %s103, %s104
      %p116 = scmp.eq.s32.totalorder %s19, 3
      %p117 = por %p115, %p116
      %p119 = scmp.ne.s32.totalorder %s104, %s118
      %p120 = scmp.eq.s32.totalorder %s19, 0
      %p121 = por %p119, %p120
      %s122 = ssub.s32 %s20, %s32
      %s123 = ssub.s32 %s21, %s28
      %s124 = sor.u32 %s122, %s123
      %p125 = scmp.eq.s32.totalorder %s124, 0
      %s127 = sadd.s32 %s126, 1
      %s128 = scalar_select %p125, %s126, %s127
      %p131 = pneg %p125
      %p132 = scmp.eq.s32.totalorder %s13, 3
      %p133 = por %p131, %p132
      %p134 = scmp.ne.s32.totalorder %s126, %s129
      %p135 = scmp.eq.s32.totalorder %s13, 0
      %p136 = por %p134, %p135
      %p137 = scmp.ne.s32.totalorder %s126, %s129
      %p138 = scmp.eq.s32.totalorder %s18, 3
      %p139 = por %p137, %p138
      %p140 = scmp.ne.s32.totalorder %s129, %s130
      %p141 = scmp.eq.s32.totalorder %s18, 0
      %p142 = por %p140, %p141
      %p143 = scmp.ne.s32.totalorder %s129, %s130
      %p144 = scmp.eq.s32.totalorder %s19, 3
      %p145 = por %p143, %p144
      %p147 = scmp.ne.s32.totalorder %s130, %s146
      %p148 = scmp.eq.s32.totalorder %s19, 0
      %p149 = por %p147, %p148
      %p150 = scmp.le.s32.totalorder 1, %s13
      %p151 = scmp.lt.s32.totalorder %s13, 5
      %p152 = pnand %p150, %p151
      %p153 = pneg %p152
      // Predicated region
      $region9: #{tpu_custom_call.1} parent=5 // pred_check
        _
      $region10: #{tpu_custom_call.1} parent=5 // pred_check_branch
        %155 = sbr.rel (%p152) target = $region12
      $region11: #{tpu_custom_call.1} parent=5 // pred_region
        %s156 = ssub.s32 %s13, 1
        // Predicated region
        $region13: #{tpu_custom_call.1} parent=11 // pred_check
          %p157 = pneg %p72
        $region14: #{tpu_custom_call.1} parent=11 // pred_check_branch
          %159 = sbr.rel (%p157) target = $region16
        $region15: #{tpu_custom_call.1} parent=11 // pred_region
          _
        $region16: #{tpu_custom_call.1} parent=11 // pred_fallthru
          _
        // Predicated region
        $region17: #{tpu_custom_call.1} parent=11 // pred_check
          %p160 = pneg %p93
        $region18: #{tpu_custom_call.1} parent=11 // pred_check_branch
          %162 = sbr.rel (%p160) target = $region20
        $region19: #{tpu_custom_call.1} parent=11 // pred_region
          _
        $region20: #{tpu_custom_call.1} parent=11 // pred_fallthru
          _
        // Predicated region
        $region21: #{tpu_custom_call.1} parent=11 // pred_check
          %p163 = pneg %p114
        $region22: #{tpu_custom_call.1} parent=11 // pred_check_branch
          %165 = sbr.rel (%p163) target = $region24
        $region23: #{tpu_custom_call.1} parent=11 // pred_region
          _
        $region24: #{tpu_custom_call.1} parent=11 // pred_fallthru
          _
      $region12: #{tpu_custom_call.1} parent=5 // pred_fallthru
        _
      %p166 = scmp.lt.s32.totalorder %s13, 4
      // Predicated region
      $region25: #{tpu_custom_call.1} parent=5 // pred_check
        %p167 = pneg %p166
      $region26: #{tpu_custom_call.1} parent=5 // pred_check_branch
        %169 = sbr.rel (%p167) target = $region28
      $region27: #{tpu_custom_call.1} parent=5 // pred_region
        // Predicated region
        $region29: #{tpu_custom_call.1} parent=27 // pred_check
          %p170 = pneg %p45
        $region30: #{tpu_custom_call.1} parent=27 // pred_check_branch
          %172 = sbr.rel (%p170) target = $region32
        $region31: #{tpu_custom_call.1} parent=27 // pred_region
          %p173 = scmp.lt.s32.totalorder %s20, 1
          %s174 = scalar_select %p173, %s20, 1
          %s175 = smul.addr %s174, 17
          %s176 = smul.addr %s175, 4
          %s177 = scalar_lea.vmem %s0, %s176
        $region32: #{tpu_custom_call.1} parent=27 // pred_fallthru
          _
      $region28: #{tpu_custom_call.1} parent=5 // pred_fallthru
        _
      %p178 = scmp.le.s32.totalorder 1, %s13
      %p179 = scmp.lt.s32.totalorder %s13, 5
      %p180 = pnand %p178, %p179
      %p181 = pneg %p180
      // Predicated region
      $region33: #{tpu_custom_call.1} parent=5 // pred_check
        _
      $region34: #{tpu_custom_call.1} parent=5 // pred_check_branch
        %183 = sbr.rel (%p180) target = $region36
      $region35: #{tpu_custom_call.1} parent=5 // pred_region
        %s184 = ssub.s32 %s13, 1
        %p185 = scmp.lt.s32.totalorder %s22, 1
        %s186 = scalar_select %p185, %s22, 1
        %s187 = smul.addr %s186, 17
        %s188 = smul.addr %s187, 4
        %s189 = scalar_lea.vmem %s0, %s188
        %p190 = pneg %p51
        %p191 = pneg %p48
        %p192 = pneg %p72
        %p193 = pneg %p69
        %p194 = pneg %p93
        %p195 = pneg %p90
        %p196 = pneg %p114
        %p197 = pneg %p111
        %p198 = pneg %p142
        %p199 = pneg %p139
        %s200 = sand.u32 %s129, 1
        %s201 = scalar_lea.sflag [#allocation3], %s200
        %s202 = sand.u32 %s129, 1
        %s203 = smul.addr %s202, 32
        %s204 = scalar_lea.vmem [#allocation2], %s203
        %p205 = scmp.lt.s32.totalorder %s22, 1
        %s206 = scalar_select %p205, %s22, 1
        %s207 = smul.addr %s206, 17
        %s208 = smul.addr %s207, 4
        %s209 = scalar_lea.vmem %s0, %s208
        %s210 = smul.u32 4, %s23
        %s211 = smul.u32 %s23, 8
        %s212 = smul.u32 %s211, 4
        %s213 = scalar_lea.vmem %s209, %s212
        %v214 = vld [vmem:[%s213] sm:$0xf]
        %v215 = vld [vmem:[%s213 + $0x4] sm:$0xf]
        %v216 = vld [vmem:[%s213 + $0x8] sm:$0xf]
        %v217 = vld [vmem:[%s213 + $0xc] sm:$0xf]
        %v218 = vld [vmem:[%s213 + $0x10] sm:$0xf]
        %v219 = vld [vmem:[%s213 + $0x14] sm:$0xf]
        %v220 = vld [vmem:[%s213 + $0x18] sm:$0xf]
        %v221 = vld [vmem:[%s213 + $0x1c] sm:$0xf]
        %v222 = vld [vmem:[%s213 + $0x20] sm:$0xf]
        %v223 = vlaneseq
        %v224 = vshrl.u32 %v223, 7
        %v225 = vadd.s32 %v224, 8
        %v226 = vlaneseq
        %v227 = vand.u32 %v226, 127
        %v228 = vmul.u32 %v224, 2
        %v229 = vmul.u32 %v225, 2
        %vm230 = vcmp.eq.s32.totalorder %v227, %v228
        %vm231 = vcmp.eq.s32.totalorder %v227, %v229
        %v232 = vsel %vm230, 1, 0
        %v233 = vsel %vm231, 1, 0
        %v234 = vcvt.s32.f32 %v232
        %v235 = vcvt.s32.f32 %v233
        %v236 = vadd.s32 %v228, 1
        %v237 = vadd.s32 %v229, 1
        %vm238 = vcmp.eq.s32.totalorder %v227, %v236
        %vm239 = vcmp.eq.s32.totalorder %v227, %v237
        %v240 = vsel %vm238, 1, 0
        %v241 = vsel %vm239, 1, 0
        %v242 = vcvt.s32.f32 %v240
        %v243 = vcvt.s32.f32 %v241
        %v244 = vsub.s32 %v228, 1
        %v245 = vsub.s32 %v229, 1
        %vm246 = vcmp.eq.s32.totalorder %v227, %v244
        %vm247 = vcmp.eq.s32.totalorder %v227, %v245
        %v248 = vsel %vm246, 1, 0
        %v249 = vsel %vm247, 1, 0
        %v250 = vcvt.s32.f32 %v248
        %v251 = vcvt.s32.f32 %v249
        %261 = vst [vmem:[#allocation1] ss:$2 sm:$0xff] %v214
        %s262 = scalar_lea.vmem [#allocation1], 1
        %263 = vst [vmem:[%s262] ss:$2 sm:$0xff] %v215
        %s264 = scalar_lea.vmem [#allocation1], 16
        %265 = vst [vmem:[%s264] ss:$2 sm:$0xff] %v216
        %s266 = scalar_lea.vmem [#allocation1], 17
        %267 = vst [vmem:[%s266] ss:$2 sm:$0xff] %v217
        %s268 = scalar_lea.vmem [#allocation1], 32
        %269 = vst [vmem:[%s268] ss:$2 sm:$0xff] %v218
        %s270 = scalar_lea.vmem [#allocation1], 33
        %271 = vst [vmem:[%s270] ss:$2 sm:$0xff] %v219
        %s272 = scalar_lea.vmem [#allocation1], 48
        %273 = vst [vmem:[%s272] ss:$2 sm:$0xff] %v220
        %s274 = scalar_lea.vmem [#allocation1], 49
        %275 = vst [vmem:[%s274] ss:$2 sm:$0xff] %v221
        %v276 = vld.sshfl [vmem:[#allocation1] sm:$0xff pattern:$0x75316420]
        %v277 = vld.sshfl [vmem:[#allocation1 + $0x10] sm:$0xff pattern:$0x75316420]
        %v278 = vld.sshfl [vmem:[#allocation1 + $0x20] sm:$0xff pattern:$0x75316420]
        %v279 = vld.sshfl [vmem:[#allocation1 + $0x30] sm:$0xff pattern:$0x75316420]
        %280 = vst [vmem:[#allocation1] ss:$2 sm:$0xff] %v222
        %v281 = vld.sshfl [vmem:[#allocation1] sm:$0xff pattern:$0x75316420]
        %vm282 = vcmask 130048
        %v283 = vsel %vm282, %v276, 0
        %v285 = vsel %vm282, %v277, 0
        %v287 = vsel %vm282, %v278, 0
        %v289 = vsel %vm282, %v279, 0
        %v291 = vsel %vm282, %v281, 0
        %293 = vmatpush.msra.mxu0 0.0
        %294 = vmatpush.msra.mxu0 0.0
        %295 = vmatpush.msra.mxu0 0.0
        %296 = vmatpush.msra.mxu0 0.0
        %297 = vmatpush.msra.mxu0 0.0
        %298 = vmatpush.msra.mxu0 0.0
        %299 = vmatpush.msra.mxu0 0.0
        %300 = vmatpush.msra.mxu0 0.0
        %301 = vmatpush.msra.mxu0 0.0
        %302 = vmatpush.msra.mxu0 0.0
        %303 = vmatpush.msra.mxu0 0.0
        %304 = vmatpush.msra.mxu0 0.0
        %305 = vmatpush.msra.mxu0 0.0
        %306 = vmatpush.msra.mxu0 0.0
        %307 = vmatpush.msra.mxu0 %v235
        %308 = vmatpush.msra.mxu0 %v234
        %309 = vmatmul.f32.gmra.mxu0 %v283
        %v310 = vpop.f32.mrf.mxu0
        %v311 = vadd.f32 0.0, %v310
        %312 = vmatmul.f32.gmra.mxu0 %v285
        %v313 = vpop.f32.mrf.mxu0
        %v314 = vadd.f32 0.0, %v313
        %315 = vmatmul.f32.gmra.mxu0 %v287
        %v316 = vpop.f32.mrf.mxu0
        %v317 = vadd.f32 0.0, %v316
        %318 = vmatmul.f32.gmra.mxu0 %v289
        %v319 = vpop.f32.mrf.mxu0
        %v320 = vadd.f32 0.0, %v319
        %321 = vmatmul.f32.gmra.mxu0 %v291
        %v322 = vpop.f32.mrf.mxu0
        %v323 = vadd.f32 0.0, %v322
        %324 = vdwg.mxu0
        %325 = vst [vmem:[#allocation1] ss:$2 sm:$0xff] %v214
        %s326 = scalar_lea.vmem [#allocation1], 1
        %327 = vst [vmem:[%s326] ss:$2 sm:$0xff] %v215
        %s328 = scalar_lea.vmem [#allocation1], 16
        %329 = vst [vmem:[%s328] ss:$2 sm:$0xff] %v216
        %s330 = scalar_lea.vmem [#allocation1], 17
        %331 = vst [vmem:[%s330] ss:$2 sm:$0xff] %v217
        %s332 = scalar_lea.vmem [#allocation1], 32
        %333 = vst [vmem:[%s332] ss:$2 sm:$0xff] %v218
        %s334 = scalar_lea.vmem [#allocation1], 33
        %335 = vst [vmem:[%s334] ss:$2 sm:$0xff] %v219
        %s336 = scalar_lea.vmem [#allocation1], 48
        %337 = vst [vmem:[%s336] ss:$2 sm:$0xff] %v220
        %s338 = scalar_lea.vmem [#allocation1], 49
        %339 = vst [vmem:[%s338] ss:$2 sm:$0xff] %v221
        %v340 = vld.sshfl [vmem:[#allocation1] sm:$0xff pattern:$0x75316420]
        %v341 = vld.sshfl [vmem:[#allocation1 + $0x10] sm:$0xff pattern:$0x75316420]
        %v342 = vld.sshfl [vmem:[#allocation1 + $0x20] sm:$0xff pattern:$0x75316420]
        %v343 = vld.sshfl [vmem:[#allocation1 + $0x30] sm:$0xff pattern:$0x75316420]
        %344 = vst [vmem:[#allocation1] ss:$2 sm:$0xff] %v222
        %v345 = vld.sshfl [vmem:[#allocation1] sm:$0xff pattern:$0x75316420]
        %v346 = vsel %vm282, %v340, 0
        %v348 = vsel %vm282, %v341, 0
        %v350 = vsel %vm282, %v342, 0
        %v352 = vsel %vm282, %v343, 0
        %v354 = vsel %vm282, %v345, 0
        %356 = vmatpush.msra.mxu0 0.0
        %357 = vmatpush.msra.mxu0 0.0
        %358 = vmatpush.msra.mxu0 0.0
        %359 = vmatpush.msra.mxu0 0.0
        %360 = vmatpush.msra.mxu0 0.0
        %361 = vmatpush.msra.mxu0 0.0
        %362 = vmatpush.msra.mxu0 0.0
        %363 = vmatpush.msra.mxu0 0.0
        %364 = vmatpush.msra.mxu0 0.0
        %365 = vmatpush.msra.mxu0 0.0
        %366 = vmatpush.msra.mxu0 0.0
        %367 = vmatpush.msra.mxu0 0.0
        %368 = vmatpush.msra.mxu0 0.0
        %369 = vmatpush.msra.mxu0 0.0
        %370 = vmatpush.msra.mxu0 %v243
        %371 = vmatpush.msra.mxu0 %v242
        %372 = vmatmul.f32.gmra.mxu0 %v346
        %v373 = vpop.f32.mrf.mxu0
        %v374 = vadd.f32 0.0, %v373
        %375 = vmatmul.f32.gmra.mxu0 %v348
        %v376 = vpop.f32.mrf.mxu0
        %v377 = vadd.f32 0.0, %v376
        %378 = vmatmul.f32.gmra.mxu0 %v350
        %v379 = vpop.f32.mrf.mxu0
        %v380 = vadd.f32 0.0, %v379
        %381 = vmatmul.f32.gmra.mxu0 %v352
        %v382 = vpop.f32.mrf.mxu0
        %v383 = vadd.f32 0.0, %v382
        %384 = vmatmul.f32.gmra.mxu0 %v354
        %v385 = vpop.f32.mrf.mxu0
        %v386 = vadd.f32 0.0, %v385
        %387 = vdwg.mxu0
        %388 = vst [vmem:[#allocation1] ss:$2 sm:$0xff] %v214
        %s389 = scalar_lea.vmem [#allocation1], 1
        %390 = vst [vmem:[%s389] ss:$2 sm:$0xff] %v215
        %s391 = scalar_lea.vmem [#allocation1], 16
        %392 = vst [vmem:[%s391] ss:$2 sm:$0xff] %v216
        %s393 = scalar_lea.vmem [#allocation1], 17
        %394 = vst [vmem:[%s393] ss:$2 sm:$0xff] %v217
        %s395 = scalar_lea.vmem [#allocation1], 32
        %396 = vst [vmem:[%s395] ss:$2 sm:$0xff] %v218
        %s397 = scalar_lea.vmem [#allocation1], 33
        %398 = vst [vmem:[%s397] ss:$2 sm:$0xff] %v219
        %s399 = scalar_lea.vmem [#allocation1], 48
        %400 = vst [vmem:[%s399] ss:$2 sm:$0xff] %v220
        %s401 = scalar_lea.vmem [#allocation1], 49
        %402 = vst [vmem:[%s401] ss:$2 sm:$0xff] %v221
        %v403 = vld.sshfl [vmem:[#allocation1] sm:$0xff pattern:$0x75316420]
        %v404 = vld.sshfl [vmem:[#allocation1 + $0x10] sm:$0xff pattern:$0x75316420]
        %v405 = vld.sshfl [vmem:[#allocation1 + $0x20] sm:$0xff pattern:$0x75316420]
        %v406 = vld.sshfl [vmem:[#allocation1 + $0x30] sm:$0xff pattern:$0x75316420]
        %407 = vst [vmem:[#allocation1] ss:$2 sm:$0xff] %v222
        %v408 = vld.sshfl [vmem:[#allocation1] sm:$0xff pattern:$0x75316420]
        %v409 = vsel %vm282, %v403, 0
        %v411 = vsel %vm282, %v404, 0
        %v413 = vsel %vm282, %v405, 0
        %v415 = vsel %vm282, %v406, 0
        %v417 = vsel %vm282, %v408, 0
        %419 = vmatpush.msra.mxu0 0.0
        %420 = vmatpush.msra.mxu0 0.0
        %421 = vmatpush.msra.mxu0 0.0
        %422 = vmatpush.msra.mxu0 0.0
        %423 = vmatpush.msra.mxu0 0.0
        %424 = vmatpush.msra.mxu0 0.0
        %425 = vmatpush.msra.mxu0 0.0
        %426 = vmatpush.msra.mxu0 0.0
        %427 = vmatpush.msra.mxu0 0.0
        %428 = vmatpush.msra.mxu0 0.0
        %429 = vmatpush.msra.mxu0 0.0
        %430 = vmatpush.msra.mxu0 0.0
        %431 = vmatpush.msra.mxu0 0.0
        %432 = vmatpush.msra.mxu0 0.0
        %433 = vmatpush.msra.mxu0 %v251
        %434 = vmatpush.msra.mxu0 %v250
        %435 = vmatmul.f32.gmra.mxu0 %v409
        %v436 = vpop.f32.mrf.mxu0
        %v437 = vadd.f32 0.0, %v436
        %438 = vmatmul.f32.gmra.mxu0 %v411
        %v439 = vpop.f32.mrf.mxu0
        %v440 = vadd.f32 0.0, %v439
        %441 = vmatmul.f32.gmra.mxu0 %v413
        %v442 = vpop.f32.mrf.mxu0
        %v443 = vadd.f32 0.0, %v442
        %444 = vmatmul.f32.gmra.mxu0 %v415
        %v445 = vpop.f32.mrf.mxu0
        %v446 = vadd.f32 0.0, %v445
        %447 = vmatmul.f32.gmra.mxu0 %v417
        %v448 = vpop.f32.mrf.mxu0
        %v449 = vadd.f32 0.0, %v448
        %450 = vdwg.mxu0
        %v456 = vrot.slane %v311, 4
        %v457 = vrot.slane %v314, 4
        %v458 = vrot.slane %v317, 4
        %v459 = vrot.slane %v320, 4
        %v468 = vrot.slane %v374, 4
        %v469 = vrot.slane %v377, 4
        %v470 = vrot.slane %v380, 4
        %v471 = vrot.slane %v383, 4
        %v481 = vrot.slane %v437, 4
        %v482 = vrot.slane %v440, 4
        %v483 = vrot.slane %v443, 4
        %v484 = vrot.slane %v446, 4
        %s489 = scalar_lea.vmem [#allocation1], 1
        %490 = vst [vmem:[%s489] ss:$2 sm:$0xff] %v374
        %v491 = vld.sshfl [vmem:[#allocation1] sm:$0xff pattern:$0x75316420]
        %s492 = scalar_lea.vmem [#allocation1], 17
        %493 = vst [vmem:[%s492] ss:$2 sm:$0xff] %v468
        %v494 = vld.sshfl [vmem:[#allocation1 + $0x10] sm:$0xff pattern:$0x75316420]
        %s495 = scalar_lea.vmem [#allocation1], 33
        %496 = vst [vmem:[%s495] ss:$2 sm:$0xff] %v377
        %v497 = vld.sshfl [vmem:[#allocation1 + $0x20] sm:$0xff pattern:$0x75316420]
        %s498 = scalar_lea.vmem [#allocation1], 49
        %499 = vst [vmem:[%s498] ss:$2 sm:$0xff] %v469
        %v500 = vld.sshfl [vmem:[#allocation1 + $0x30] sm:$0xff pattern:$0x75316420]
        %501 = vst [vmem:[%s489] ss:$2 sm:$0xff] %v380
        %v502 = vld.sshfl [vmem:[#allocation1] sm:$0xff pattern:$0x75316420]
        %503 = vst [vmem:[%s492] ss:$2 sm:$0xff] %v470
        %v504 = vld.sshfl [vmem:[#allocation1 + $0x10] sm:$0xff pattern:$0x75316420]
        %505 = vst [vmem:[%s495] ss:$2 sm:$0xff] %v383
        %v506 = vld.sshfl [vmem:[#allocation1 + $0x20] sm:$0xff pattern:$0x75316420]
        %507 = vst [vmem:[%s498] ss:$2 sm:$0xff] %v471
        %v508 = vld.sshfl [vmem:[#allocation1 + $0x30] sm:$0xff pattern:$0x75316420]
        %vm517 = vcmask 1043456
        %v518 = vsel %vm517, %v311, %v491
        %v519 = vsel %vm517, %v456, %v494
        %v520 = vsel %vm517, %v314, %v497
        %v521 = vsel %vm517, %v457, %v500
        %v522 = vsel %vm517, %v317, %v502
        %v523 = vsel %vm517, %v458, %v504
        %v524 = vsel %vm517, %v320, %v506
        %v525 = vsel %vm517, %v459, %v508
        %s526 = scalar_lea.vmem [#allocation1], 1
        %527 = vst [vmem:[%s526] ss:$2 sm:$0xff] %v374
        %v528 = vld.sshfl [vmem:[#allocation1] sm:$0xff pattern:$0x75316420]
        %s529 = scalar_lea.vmem [#allocation1], 17
        %530 = vst [vmem:[%s529] ss:$2 sm:$0xff] %v468
        %v531 = vld.sshfl [vmem:[#allocation1 + $0x10] sm:$0xff pattern:$0x75316420]
        %s532 = scalar_lea.vmem [#allocation1], 33
        %533 = vst [vmem:[%s532] ss:$2 sm:$0xff] %v377
        %v534 = vld.sshfl [vmem:[#allocation1 + $0x20] sm:$0xff pattern:$0x75316420]
        %s535 = scalar_lea.vmem [#allocation1], 49
        %536 = vst [vmem:[%s535] ss:$2 sm:$0xff] %v469
        %v537 = vld.sshfl [vmem:[#allocation1 + $0x30] sm:$0xff pattern:$0x75316420]
        %538 = vst [vmem:[%s526] ss:$2 sm:$0xff] %v380
        %v539 = vld.sshfl [vmem:[#allocation1] sm:$0xff pattern:$0x75316420]
        %540 = vst [vmem:[%s529] ss:$2 sm:$0xff] %v470
        %v541 = vld.sshfl [vmem:[#allocation1 + $0x10] sm:$0xff pattern:$0x75316420]
        %542 = vst [vmem:[%s532] ss:$2 sm:$0xff] %v383
        %v543 = vld.sshfl [vmem:[#allocation1 + $0x20] sm:$0xff pattern:$0x75316420]
        %544 = vst [vmem:[%s535] ss:$2 sm:$0xff] %v471
        %v545 = vld.sshfl [vmem:[#allocation1 + $0x30] sm:$0xff pattern:$0x75316420]
        %s554 = scalar_lea.vmem [#allocation1], 1
        %555 = vst [vmem:[%s554] ss:$2 sm:$0xff] %v456
        %v556 = vld.sshfl [vmem:[#allocation1] sm:$0xff pattern:$0x75316420]
        %s557 = scalar_lea.vmem [#allocation1], 17
        %558 = vst [vmem:[%s557] ss:$2 sm:$0xff] %v314
        %v559 = vld.sshfl [vmem:[#allocation1 + $0x10] sm:$0xff pattern:$0x75316420]
        %s560 = scalar_lea.vmem [#allocation1], 33
        %561 = vst [vmem:[%s560] ss:$2 sm:$0xff] %v457
        %v562 = vld.sshfl [vmem:[#allocation1 + $0x20] sm:$0xff pattern:$0x75316420]
        %s563 = scalar_lea.vmem [#allocation1], 49
        %564 = vst [vmem:[%s563] ss:$2 sm:$0xff] %v317
        %v565 = vld.sshfl [vmem:[#allocation1 + $0x30] sm:$0xff pattern:$0x75316420]
        %566 = vst [vmem:[%s554] ss:$2 sm:$0xff] %v458
        %v567 = vld.sshfl [vmem:[#allocation1] sm:$0xff pattern:$0x75316420]
        %568 = vst [vmem:[%s557] ss:$2 sm:$0xff] %v320
        %v569 = vld.sshfl [vmem:[#allocation1 + $0x10] sm:$0xff pattern:$0x75316420]
        %570 = vst [vmem:[%s560] ss:$2 sm:$0xff] %v459
        %v571 = vld.sshfl [vmem:[#allocation1 + $0x20] sm:$0xff pattern:$0x75316420]
        %572 = vst [vmem:[%s563] ss:$2 sm:$0xff] %v323
        %v573 = vld.sshfl [vmem:[#allocation1 + $0x30] sm:$0xff pattern:$0x75316420]
        %s582 = scalar_lea.vmem [#allocation1], 1
        %583 = vst [vmem:[%s582] ss:$2 sm:$0xff] %v481
        %v584 = vld.sshfl [vmem:[#allocation1] sm:$0xff pattern:$0x75316420]
        %s585 = scalar_lea.vmem [#allocation1], 17
        %586 = vst [vmem:[%s585] ss:$2 sm:$0xff] %v440
        %v587 = vld.sshfl [vmem:[#allocation1 + $0x10] sm:$0xff pattern:$0x75316420]
        %s588 = scalar_lea.vmem [#allocation1], 33
        %589 = vst [vmem:[%s588] ss:$2 sm:$0xff] %v482
        %v590 = vld.sshfl [vmem:[#allocation1 + $0x20] sm:$0xff pattern:$0x75316420]
        %s591 = scalar_lea.vmem [#allocation1], 49
        %592 = vst [vmem:[%s591] ss:$2 sm:$0xff] %v443
        %v593 = vld.sshfl [vmem:[#allocation1 + $0x30] sm:$0xff pattern:$0x75316420]
        %594 = vst [vmem:[%s582] ss:$2 sm:$0xff] %v483
        %v595 = vld.sshfl [vmem:[#allocation1] sm:$0xff pattern:$0x75316420]
        %596 = vst [vmem:[%s585] ss:$2 sm:$0xff] %v446
        %v597 = vld.sshfl [vmem:[#allocation1 + $0x10] sm:$0xff pattern:$0x75316420]
        %598 = vst [vmem:[%s588] ss:$2 sm:$0xff] %v484
        %v599 = vld.sshfl [vmem:[#allocation1 + $0x20] sm:$0xff pattern:$0x75316420]
        %600 = vst [vmem:[%s591] ss:$2 sm:$0xff] %v449
        %v601 = vld.sshfl [vmem:[#allocation1 + $0x30] sm:$0xff pattern:$0x75316420]
        %v610 = vsel %vm517, %v311, %v528
        %v611 = vsel %vm517, %v456, %v531
        %v612 = vsel %vm517, %v314, %v534
        %v613 = vsel %vm517, %v457, %v537
        %v614 = vsel %vm517, %v317, %v539
        %v615 = vsel %vm517, %v458, %v541
        %v616 = vsel %vm517, %v320, %v543
        %v617 = vsel %vm517, %v459, %v545
        %v618 = vsel %vm517, %v437, %v556
        %v619 = vsel %vm517, %v481, %v559
        %v620 = vsel %vm517, %v440, %v562
        %v621 = vsel %vm517, %v482, %v565
        %v622 = vsel %vm517, %v443, %v567
        %v623 = vsel %vm517, %v483, %v569
        %v624 = vsel %vm517, %v446, %v571
        %v625 = vsel %vm517, %v484, %v573
        %v626 = vsel %vm517, %v468, %v584
        %v627 = vsel %vm517, %v377, %v587
        %v628 = vsel %vm517, %v469, %v590
        %v629 = vsel %vm517, %v380, %v593
        %v630 = vsel %vm517, %v470, %v595
        %v631 = vsel %vm517, %v383, %v597
        %v632 = vsel %vm517, %v471, %v599
        %v633 = vsel %vm517, %v386, %v601
        %v634 = vld [vmem:[%s1] sm:$0xff]
        %v635 = vld [vmem:[%s2] sm:$0xff]
        %v636 = vld [vmem:[%s3] sm:$0xff]
        %638 = vset.pattern.permute.xlu0 0
        %639 = vperm.xlu0 %638, %v636
        %v640 = vpop.permute.xlu0 %639
        %vm642 = vcmask 97280
        %v644 = vsel %vm642, %v634, 0
        %v646 = vsel %vm517, %v437, 0
        %648 = vmatpush.msra.mxu0 0.0
        %649 = vmatpush.msra.mxu0 0.0
        %650 = vmatpush.msra.mxu0 0.0
        %651 = vmatpush.msra.mxu0 0.0
        %652 = vmatpush.msra.mxu0 0.0
        %653 = vmatpush.msra.mxu0 0.0
        %654 = vmatpush.msra.mxu0 0.0
        %655 = vmatpush.msra.mxu0 0.0
        %656 = vmatpush.msra.mxu0 0.0
        %657 = vmatpush.msra.mxu0 0.0
        %658 = vmatpush.msra.mxu0 0.0
        %659 = vmatpush.msra.mxu0 0.0
        %660 = vmatpush.msra.mxu0 0.0
        %661 = vmatpush.msra.mxu0 0.0
        %662 = vmatpush.msra.mxu0 %v646
        %663 = vmatpush.msra.mxu0 %v518
        %664 = vmatmul.f32.gmra.mxu0 %v644
        %v665 = vpop.f32.mrf.mxu0
        %v666 = vadd.f32 %v640, %v665
        %667 = vdwg.mxu0
        %v668 = vsel %vm517, %v481, 0
        %670 = vmatpush.msra.mxu0 0.0
        %671 = vmatpush.msra.mxu0 0.0
        %672 = vmatpush.msra.mxu0 0.0
        %673 = vmatpush.msra.mxu0 0.0
        %674 = vmatpush.msra.mxu0 0.0
        %675 = vmatpush.msra.mxu0 0.0
        %676 = vmatpush.msra.mxu0 0.0
        %677 = vmatpush.msra.mxu0 0.0
        %678 = vmatpush.msra.mxu0 0.0
        %679 = vmatpush.msra.mxu0 0.0
        %680 = vmatpush.msra.mxu0 0.0
        %681 = vmatpush.msra.mxu0 0.0
        %682 = vmatpush.msra.mxu0 0.0
        %683 = vmatpush.msra.mxu0 0.0
        %684 = vmatpush.msra.mxu0 %v668
        %685 = vmatpush.msra.mxu0 %v519
        %686 = vmatmul.f32.gmra.mxu0 %v644
        %v687 = vpop.f32.mrf.mxu0
        %v688 = vadd.f32 %v640, %v687
        %689 = vdwg.mxu0
        %v690 = vsel %vm517, %v440, 0
        %692 = vmatpush.msra.mxu0 0.0
        %693 = vmatpush.msra.mxu0 0.0
        %694 = vmatpush.msra.mxu0 0.0
        %695 = vmatpush.msra.mxu0 0.0
        %696 = vmatpush.msra.mxu0 0.0
        %697 = vmatpush.msra.mxu0 0.0
        %698 = vmatpush.msra.mxu0 0.0
        %699 = vmatpush.msra.mxu0 0.0
        %700 = vmatpush.msra.mxu0 0.0
        %701 = vmatpush.msra.mxu0 0.0
        %702 = vmatpush.msra.mxu0 0.0
        %703 = vmatpush.msra.mxu0 0.0
        %704 = vmatpush.msra.mxu0 0.0
        %705 = vmatpush.msra.mxu0 0.0
        %706 = vmatpush.msra.mxu0 %v690
        %707 = vmatpush.msra.mxu0 %v520
        %708 = vmatmul.f32.gmra.mxu0 %v644
        %v709 = vpop.f32.mrf.mxu0
        %v710 = vadd.f32 %v640, %v709
        %711 = vdwg.mxu0
        %v712 = vsel %vm517, %v482, 0
        %714 = vmatpush.msra.mxu0 0.0
        %715 = vmatpush.msra.mxu0 0.0
        %716 = vmatpush.msra.mxu0 0.0
        %717 = vmatpush.msra.mxu0 0.0
        %718 = vmatpush.msra.mxu0 0.0
        %719 = vmatpush.msra.mxu0 0.0
        %720 = vmatpush.msra.mxu0 0.0
        %721 = vmatpush.msra.mxu0 0.0
        %722 = vmatpush.msra.mxu0 0.0
        %723 = vmatpush.msra.mxu0 0.0
        %724 = vmatpush.msra.mxu0 0.0
        %725 = vmatpush.msra.mxu0 0.0
        %726 = vmatpush.msra.mxu0 0.0
        %727 = vmatpush.msra.mxu0 0.0
        %728 = vmatpush.msra.mxu0 %v712
        %729 = vmatpush.msra.mxu0 %v521
        %730 = vmatmul.f32.gmra.mxu0 %v644
        %v731 = vpop.f32.mrf.mxu0
        %v732 = vadd.f32 %v640, %v731
        %733 = vdwg.mxu0
        %v734 = vsel %vm517, %v443, 0
        %736 = vmatpush.msra.mxu0 0.0
        %737 = vmatpush.msra.mxu0 0.0
        %738 = vmatpush.msra.mxu0 0.0
        %739 = vmatpush.msra.mxu0 0.0
        %740 = vmatpush.msra.mxu0 0.0
        %741 = vmatpush.msra.mxu0 0.0
        %742 = vmatpush.msra.mxu0 0.0
        %743 = vmatpush.msra.mxu0 0.0
        %744 = vmatpush.msra.mxu0 0.0
        %745 = vmatpush.msra.mxu0 0.0
        %746 = vmatpush.msra.mxu0 0.0
        %747 = vmatpush.msra.mxu0 0.0
        %748 = vmatpush.msra.mxu0 0.0
        %749 = vmatpush.msra.mxu0 0.0
        %750 = vmatpush.msra.mxu0 %v734
        %751 = vmatpush.msra.mxu0 %v522
        %752 = vmatmul.f32.gmra.mxu0 %v644
        %v753 = vpop.f32.mrf.mxu0
        %v754 = vadd.f32 %v640, %v753
        %755 = vdwg.mxu0
        %v756 = vsel %vm517, %v483, 0
        %758 = vmatpush.msra.mxu0 0.0
        %759 = vmatpush.msra.mxu0 0.0
        %760 = vmatpush.msra.mxu0 0.0
        %761 = vmatpush.msra.mxu0 0.0
        %762 = vmatpush.msra.mxu0 0.0
        %763 = vmatpush.msra.mxu0 0.0
        %764 = vmatpush.msra.mxu0 0.0
        %765 = vmatpush.msra.mxu0 0.0
        %766 = vmatpush.msra.mxu0 0.0
        %767 = vmatpush.msra.mxu0 0.0
        %768 = vmatpush.msra.mxu0 0.0
        %769 = vmatpush.msra.mxu0 0.0
        %770 = vmatpush.msra.mxu0 0.0
        %771 = vmatpush.msra.mxu0 0.0
        %772 = vmatpush.msra.mxu0 %v756
        %773 = vmatpush.msra.mxu0 %v523
        %774 = vmatmul.f32.gmra.mxu0 %v644
        %v775 = vpop.f32.mrf.mxu0
        %v776 = vadd.f32 %v640, %v775
        %777 = vdwg.mxu0
        %v778 = vsel %vm517, %v446, 0
        %780 = vmatpush.msra.mxu0 0.0
        %781 = vmatpush.msra.mxu0 0.0
        %782 = vmatpush.msra.mxu0 0.0
        %783 = vmatpush.msra.mxu0 0.0
        %784 = vmatpush.msra.mxu0 0.0
        %785 = vmatpush.msra.mxu0 0.0
        %786 = vmatpush.msra.mxu0 0.0
        %787 = vmatpush.msra.mxu0 0.0
        %788 = vmatpush.msra.mxu0 0.0
        %789 = vmatpush.msra.mxu0 0.0
        %790 = vmatpush.msra.mxu0 0.0
        %791 = vmatpush.msra.mxu0 0.0
        %792 = vmatpush.msra.mxu0 0.0
        %793 = vmatpush.msra.mxu0 0.0
        %794 = vmatpush.msra.mxu0 %v778
        %795 = vmatpush.msra.mxu0 %v524
        %796 = vmatmul.f32.gmra.mxu0 %v644
        %v797 = vpop.f32.mrf.mxu0
        %v798 = vadd.f32 %v640, %v797
        %799 = vdwg.mxu0
        %v800 = vsel %vm517, %v484, 0
        %802 = vmatpush.msra.mxu0 0.0
        %803 = vmatpush.msra.mxu0 0.0
        %804 = vmatpush.msra.mxu0 0.0
        %805 = vmatpush.msra.mxu0 0.0
        %806 = vmatpush.msra.mxu0 0.0
        %807 = vmatpush.msra.mxu0 0.0
        %808 = vmatpush.msra.mxu0 0.0
        %809 = vmatpush.msra.mxu0 0.0
        %810 = vmatpush.msra.mxu0 0.0
        %811 = vmatpush.msra.mxu0 0.0
        %812 = vmatpush.msra.mxu0 0.0
        %813 = vmatpush.msra.mxu0 0.0
        %814 = vmatpush.msra.mxu0 0.0
        %815 = vmatpush.msra.mxu0 0.0
        %816 = vmatpush.msra.mxu0 %v800
        %817 = vmatpush.msra.mxu0 %v525
        %818 = vmatmul.f32.gmra.mxu0 %v644
        %v819 = vpop.f32.mrf.mxu0
        %v820 = vadd.f32 %v640, %v819
        %821 = vdwg.mxu0
        %v822 = vmax.f32 %v666, 0.0
        %v823 = vmax.f32 %v688, 0.0
        %v824 = vmax.f32 %v710, 0.0
        %v825 = vmax.f32 %v732, 0.0
        %v826 = vmax.f32 %v754, 0.0
        %v827 = vmax.f32 %v776, 0.0
        %v828 = vmax.f32 %v798, 0.0
        %v829 = vmax.f32 %v820, 0.0
        %vm830 = vcmask 195584
        %v832 = vsel %vm830, %v635, 0
        %834 = vmatpush.msra.mxu0 0.0
        %835 = vmatpush.msra.mxu0 0.0
        %836 = vmatpush.msra.mxu0 0.0
        %837 = vmatpush.msra.mxu0 0.0
        %838 = vmatpush.msra.mxu0 0.0
        %839 = vmatpush.msra.mxu0 0.0
        %840 = vmatpush.msra.mxu0 0.0
        %841 = vmatpush.msra.mxu0 0.0
        %842 = vmatpush.msra.mxu0 0.0
        %843 = vmatpush.msra.mxu0 0.0
        %844 = vmatpush.msra.mxu0 0.0
        %845 = vmatpush.msra.mxu0 0.0
        %846 = vmatpush.msra.mxu0 0.0
        %847 = vmatpush.msra.mxu0 %v626
        %848 = vmatpush.msra.mxu0 %v618
        %849 = vmatpush.msra.mxu0 %v610
        %850 = vmatmul.f32.gmra.mxu0 %v832
        %v851 = vpop.f32.mrf.mxu0
        %v852 = vadd.f32 %v640, %v851
        %853 = vdwg.mxu0
        %854 = vmatpush.msra.mxu0 0.0
        %855 = vmatpush.msra.mxu0 0.0
        %856 = vmatpush.msra.mxu0 0.0
        %857 = vmatpush.msra.mxu0 0.0
        %858 = vmatpush.msra.mxu0 0.0
        %859 = vmatpush.msra.mxu0 0.0
        %860 = vmatpush.msra.mxu0 0.0
        %861 = vmatpush.msra.mxu0 0.0
        %862 = vmatpush.msra.mxu0 0.0
        %863 = vmatpush.msra.mxu0 0.0
        %864 = vmatpush.msra.mxu0 0.0
        %865 = vmatpush.msra.mxu0 0.0
        %866 = vmatpush.msra.mxu0 0.0
        %867 = vmatpush.msra.mxu0 %v627
        %868 = vmatpush.msra.mxu0 %v619
        %869 = vmatpush.msra.mxu0 %v611
        %870 = vmatmul.f32.gmra.mxu0 %v832
        %v871 = vpop.f32.mrf.mxu0
        %v872 = vadd.f32 %v640, %v871
        %873 = vdwg.mxu0
        %874 = vmatpush.msra.mxu0 0.0
        %875 = vmatpush.msra.mxu0 0.0
        %876 = vmatpush.msra.mxu0 0.0
        %877 = vmatpush.msra.mxu0 0.0
        %878 = vmatpush.msra.mxu0 0.0
        %879 = vmatpush.msra.mxu0 0.0
        %880 = vmatpush.msra.mxu0 0.0
        %881 = vmatpush.msra.mxu0 0.0
        %882 = vmatpush.msra.mxu0 0.0
        %883 = vmatpush.msra.mxu0 0.0
        %884 = vmatpush.msra.mxu0 0.0
        %885 = vmatpush.msra.mxu0 0.0
        %886 = vmatpush.msra.mxu0 0.0
        %887 = vmatpush.msra.mxu0 %v628
        %888 = vmatpush.msra.mxu0 %v620
        %889 = vmatpush.msra.mxu0 %v612
        %890 = vmatmul.f32.gmra.mxu0 %v832
        %v891 = vpop.f32.mrf.mxu0
        %v892 = vadd.f32 %v640, %v891
        %893 = vdwg.mxu0
        %894 = vmatpush.msra.mxu0 0.0
        %895 = vmatpush.msra.mxu0 0.0
        %896 = vmatpush.msra.mxu0 0.0
        %897 = vmatpush.msra.mxu0 0.0
        %898 = vmatpush.msra.mxu0 0.0
        %899 = vmatpush.msra.mxu0 0.0
        %900 = vmatpush.msra.mxu0 0.0
        %901 = vmatpush.msra.mxu0 0.0
        %902 = vmatpush.msra.mxu0 0.0
        %903 = vmatpush.msra.mxu0 0.0
        %904 = vmatpush.msra.mxu0 0.0
        %905 = vmatpush.msra.mxu0 0.0
        %906 = vmatpush.msra.mxu0 0.0
        %907 = vmatpush.msra.mxu0 %v629
        %908 = vmatpush.msra.mxu0 %v621
        %909 = vmatpush.msra.mxu0 %v613
        %910 = vmatmul.f32.gmra.mxu0 %v832
        %v911 = vpop.f32.mrf.mxu0
        %v912 = vadd.f32 %v640, %v911
        %913 = vdwg.mxu0
        %914 = vmatpush.msra.mxu0 0.0
        %915 = vmatpush.msra.mxu0 0.0
        %916 = vmatpush.msra.mxu0 0.0
        %917 = vmatpush.msra.mxu0 0.0
        %918 = vmatpush.msra.mxu0 0.0
        %919 = vmatpush.msra.mxu0 0.0
        %920 = vmatpush.msra.mxu0 0.0
        %921 = vmatpush.msra.mxu0 0.0
        %922 = vmatpush.msra.mxu0 0.0
        %923 = vmatpush.msra.mxu0 0.0
        %924 = vmatpush.msra.mxu0 0.0
        %925 = vmatpush.msra.mxu0 0.0
        %926 = vmatpush.msra.mxu0 0.0
        %927 = vmatpush.msra.mxu0 %v630
        %928 = vmatpush.msra.mxu0 %v622
        %929 = vmatpush.msra.mxu0 %v614
        %930 = vmatmul.f32.gmra.mxu0 %v832
        %v931 = vpop.f32.mrf.mxu0
        %v932 = vadd.f32 %v640, %v931
        %933 = vdwg.mxu0
        %934 = vmatpush.msra.mxu0 0.0
        %935 = vmatpush.msra.mxu0 0.0
        %936 = vmatpush.msra.mxu0 0.0
        %937 = vmatpush.msra.mxu0 0.0
        %938 = vmatpush.msra.mxu0 0.0
        %939 = vmatpush.msra.mxu0 0.0
        %940 = vmatpush.msra.mxu0 0.0
        %941 = vmatpush.msra.mxu0 0.0
        %942 = vmatpush.msra.mxu0 0.0
        %943 = vmatpush.msra.mxu0 0.0
        %944 = vmatpush.msra.mxu0 0.0
        %945 = vmatpush.msra.mxu0 0.0
        %946 = vmatpush.msra.mxu0 0.0
        %947 = vmatpush.msra.mxu0 %v631
        %948 = vmatpush.msra.mxu0 %v623
        %949 = vmatpush.msra.mxu0 %v615
        %950 = vmatmul.f32.gmra.mxu0 %v832
        %v951 = vpop.f32.mrf.mxu0
        %v952 = vadd.f32 %v640, %v951
        %953 = vdwg.mxu0
        %954 = vmatpush.msra.mxu0 0.0
        %955 = vmatpush.msra.mxu0 0.0
        %956 = vmatpush.msra.mxu0 0.0
        %957 = vmatpush.msra.mxu0 0.0
        %958 = vmatpush.msra.mxu0 0.0
        %959 = vmatpush.msra.mxu0 0.0
        %960 = vmatpush.msra.mxu0 0.0
        %961 = vmatpush.msra.mxu0 0.0
        %962 = vmatpush.msra.mxu0 0.0
        %963 = vmatpush.msra.mxu0 0.0
        %964 = vmatpush.msra.mxu0 0.0
        %965 = vmatpush.msra.mxu0 0.0
        %966 = vmatpush.msra.mxu0 0.0
        %967 = vmatpush.msra.mxu0 %v632
        %968 = vmatpush.msra.mxu0 %v624
        %969 = vmatpush.msra.mxu0 %v616
        %970 = vmatmul.f32.gmra.mxu0 %v832
        %v971 = vpop.f32.mrf.mxu0
        %v972 = vadd.f32 %v640, %v971
        %973 = vdwg.mxu0
        %974 = vmatpush.msra.mxu0 0.0
        %975 = vmatpush.msra.mxu0 0.0
        %976 = vmatpush.msra.mxu0 0.0
        %977 = vmatpush.msra.mxu0 0.0
        %978 = vmatpush.msra.mxu0 0.0
        %979 = vmatpush.msra.mxu0 0.0
        %980 = vmatpush.msra.mxu0 0.0
        %981 = vmatpush.msra.mxu0 0.0
        %982 = vmatpush.msra.mxu0 0.0
        %983 = vmatpush.msra.mxu0 0.0
        %984 = vmatpush.msra.mxu0 0.0
        %985 = vmatpush.msra.mxu0 0.0
        %986 = vmatpush.msra.mxu0 0.0
        %987 = vmatpush.msra.mxu0 %v633
        %988 = vmatpush.msra.mxu0 %v625
        %989 = vmatpush.msra.mxu0 %v617
        %990 = vmatmul.f32.gmra.mxu0 %v832
        %v991 = vpop.f32.mrf.mxu0
        %v992 = vadd.f32 %v640, %v991
        %993 = vdwg.mxu0
        %v994 = vmax.f32 %v852, 0.0
        %v995 = vmax.f32 %v872, 0.0
        %v996 = vmax.f32 %v892, 0.0
        %v997 = vmax.f32 %v912, 0.0
        %v998 = vmax.f32 %v932, 0.0
        %v999 = vmax.f32 %v952, 0.0
        %v1000 = vmax.f32 %v972, 0.0
        %v1001 = vmax.f32 %v992, 0.0
        %vm1002 = vcmask 261120
        %1003 = vst.msk [vmem:[%s204] sm:$0xff] %vm1002, %v822
        %1005 = vrot.lane.b32.xlu0 %v994, 32
        %v1006 = vpop.permute.xlu0 %1005
        %vm1008 = vcmask 523520
        %1009 = vst.msk [vmem:[%s204] sm:$0xff] %vm1008, %v1006
        %1011 = vrot.lane.b32.xlu0 %v823, 64
        %v1012 = vpop.permute.xlu0 %1011
        %vm1014 = vcmask 785920
        %1015 = vst.msk [vmem:[%s204] sm:$0xff] %vm1014, %v1012
        %1017 = vrot.lane.b32.xlu0 %v995, 96
        %v1018 = vpop.permute.xlu0 %1017
        %vm1020 = vcmask 1048320
        %1021 = vst.msk [vmem:[%s204] sm:$0xff] %vm1020, %v1018
        %1022 = vst.msk [vmem:[%s204 + $0x8] sm:$0xff] %vm1002, %v824
        %1024 = vrot.lane.b32.xlu0 %v996, 32
        %v1025 = vpop.permute.xlu0 %1024
        %1027 = vst.msk [vmem:[%s204 + $0x8] sm:$0xff] %vm1008, %v1025
        %1029 = vrot.lane.b32.xlu0 %v825, 64
        %v1030 = vpop.permute.xlu0 %1029
        %1032 = vst.msk [vmem:[%s204 + $0x8] sm:$0xff] %vm1014, %v1030
        %1034 = vrot.lane.b32.xlu0 %v997, 96
        %v1035 = vpop.permute.xlu0 %1034
        %1037 = vst.msk [vmem:[%s204 + $0x8] sm:$0xff] %vm1020, %v1035
        %1038 = vst.msk [vmem:[%s204 + $0x10] sm:$0xff] %vm1002, %v826
        %1040 = vrot.lane.b32.xlu0 %v998, 32
        %v1041 = vpop.permute.xlu0 %1040
        %1043 = vst.msk [vmem:[%s204 + $0x10] sm:$0xff] %vm1008, %v1041
        %1045 = vrot.lane.b32.xlu0 %v827, 64
        %v1046 = vpop.permute.xlu0 %1045
        %1048 = vst.msk [vmem:[%s204 + $0x10] sm:$0xff] %vm1014, %v1046
        %1050 = vrot.lane.b32.xlu0 %v999, 96
        %v1051 = vpop.permute.xlu0 %1050
        %1053 = vst.msk [vmem:[%s204 + $0x10] sm:$0xff] %vm1020, %v1051
        %1054 = vst.msk [vmem:[%s204 + $0x18] sm:$0xff] %vm1002, %v828
        %1056 = vrot.lane.b32.xlu0 %v1000, 32
        %v1057 = vpop.permute.xlu0 %1056
        %1059 = vst.msk [vmem:[%s204 + $0x18] sm:$0xff] %vm1008, %v1057
        %1061 = vrot.lane.b32.xlu0 %v829, 64
        %v1062 = vpop.permute.xlu0 %1061
        %1064 = vst.msk [vmem:[%s204 + $0x18] sm:$0xff] %vm1014, %v1062
        %1066 = vrot.lane.b32.xlu0 %v1001, 96
        %v1067 = vpop.permute.xlu0 %1066
        %1069 = vst.msk [vmem:[%s204 + $0x18] sm:$0xff] %vm1020, %v1067
        %s1070 = sand.u32 %s129, 1
        %s1071 = scalar_lea.sflag [#allocation3], %s1070
        %s1072 = sand.u32 %s129, 1
        %s1073 = smul.addr %s1072, 32
        %s1074 = scalar_lea.vmem [#allocation2], %s1073
        // Predicated region
        $region37: #{tpu_custom_call.1} parent=35 // pred_check
          %p1075 = pneg %p139
        $region38: #{tpu_custom_call.1} parent=35 // pred_check_branch
          %1077 = sbr.rel (%p1075) target = $region40
        $region39: #{tpu_custom_call.1} parent=35 // pred_region
          %s1078 = smul.u32 4, %s23
          %1080 = vsyncadd %s1071, 0
          %s1081 = smul.addr %s22, 8
          %s1082 = sadd.s32 %s1078, %s1081
          %s1083 = smul.addr %s1082, 8
          %s1084 = scalar_lea.hbm %s4, %s1083
          %s1086 = sshll.u32 %s1074, 4
          %s1087 = int_to_ptr.vmem [resolvable:$true] %s1086
          %s1088 = sshll.u32 %s1084, 4
          %s1089 = int_to_ptr.hbm [resolvable:$true] %s1088
          %1091 = dma.vmem_to_hbm [thread:$0]  %s1087, 512, %s1089, %s1071
        $region40: #{tpu_custom_call.1} parent=35 // pred_fallthru
          _
      $region36: #{tpu_custom_call.1} parent=5 // pred_fallthru
        _
      %p1092 = scmp.le.s32.totalorder 2, %s13
      // Predicated region
      $region41: #{tpu_custom_call.1} parent=5 // pred_check
        %p1093 = pneg %p1092
      $region42: #{tpu_custom_call.1} parent=5 // pred_check_branch
        %1095 = sbr.rel (%p1093) target = $region44
      $region43: #{tpu_custom_call.1} parent=5 // pred_region
        %s1096 = ssub.s32 %s13, 2
        // Predicated region
        $region45: #{tpu_custom_call.1} parent=43 // pred_check
          %p1097 = pneg %p145
        $region46: #{tpu_custom_call.1} parent=43 // pred_check_branch
          %1099 = sbr.rel (%p1097) target = $region48
        $region47: #{tpu_custom_call.1} parent=43 // pred_region
          %s1100 = sand.u32 %s130, 1
          %s1101 = scalar_lea.sflag [#allocation3], %s1100
          %s1102 = sand.u32 %s130, 1
          %s1103 = smul.addr %s1102, 32
          %s1104 = scalar_lea.vmem [#allocation2], %s1103
          %1106 = dma.done %s1101, 512
        $region48: #{tpu_custom_call.1} parent=43 // pred_fallthru
          _
      $region44: #{tpu_custom_call.1} parent=5 // pred_fallthru
        _
    $region6: #{tpu_custom_call.1} parent=1 // loop_footer
      %s17 = sadd.s32 1, %s13
    $region7: #{tpu_custom_call.1} parent=1 // loop_footer_branch
      %12 = sbr.rel target = $region3
    $region8: #{tpu_custom_call.1} parent=1 // loop_exit
      _
    %1107 = vsyncpa [#allocation3], 1
    %s1108 = scalar_lea.sflag [#allocation3], 1
    %1109 = vsyncpa %s1108, 1

</llo_original>
